<compile_context>
chip_gen: v7x
topology: tpu7x:2x2x1
jax: 0.10.0
libtpu: 0.0.40
codegen_flags: <defaults>
</compile_context>

<pallas_src>
import functools

import jax
import jax.numpy as jnp
from jax.experimental import pallas as pl
from jax.experimental.pallas import tpu as pltpu


_LANE_WIDTH = 512        # lane-dense repack width (multiple of 128)


def _round_up(x: int, m: int) -> int:
    return ((x + m - 1) // m) * m


def _cdiv(a: int, b: int) -> int:
    return (a + b - 1) // b


def _default_transcendental_dtype():
    """bf16 EUP exists on v6e/v7x; v5e and older have no bf16 EUP/VPU."""
    try:
        kind = jax.devices()[0].device_kind.lower()
    except Exception:
        return jnp.float32
    if any(tag in kind for tag in ("v6", "v7", "trillium")):
        return jnp.bfloat16
    return jnp.float32


def _focal_bce_kernel(logits_ref, targets_ref, partial_ref, *, alpha, gamma,
                      bce_weight, focal_weight, chunk_rows, n_chunks,
                      trans_bf16):
    w = logits_ref.shape[1]

    def chunk_contrib(c):
        r0 = pl.multiple_of(c * chunk_rows, chunk_rows)
        x = logits_ref[pl.ds(r0, chunk_rows), :].astype(jnp.float32)
        t = targets_ref[pl.ds(r0, chunk_rows), :].astype(jnp.float32)

        neg_abs = -jnp.abs(x)
        if trans_bf16:
            # v6e/v7x: run the two heavy EUP ops in bf16 (2x vreg packing);
            # the surrounding arithmetic stays f32.
            e_n = jnp.exp(neg_abs.astype(jnp.bfloat16))
            log1p_e = jnp.log1p(e_n).astype(jnp.float32)
            e = e_n.astype(jnp.float32)
        else:
            e = jnp.exp(neg_abs)
            log1p_e = jnp.log1p(e)

        # BCEWithLogitsLoss per element: max(x,0) - x*t + log(1 + exp(-|x|)).
        ce = jnp.maximum(x, 0.0) - x * t + log1p_e

        # Stable sigmoid sharing e; one approximate EUP reciprocal.
        inv = pl.reciprocal(1.0 + e, approx=True)
        p = jnp.where(x >= 0.0, inv, e * inv)

        # 1 - p_t == p + t - 2*p*t   (p_t = p*t + (1-p)*(1-t)).
        one_minus_pt = p + t - 2.0 * (p * t)
        g = float(gamma)
        if g == 2.0:            # plain VPU square instead of EUP pow
            mod = one_minus_pt * one_minus_pt
        elif g == 1.0:
            mod = one_minus_pt
        elif g == 0.0:
            mod = jnp.ones_like(one_minus_pt)
        else:                   # clamp guards tiny negatives from approx sigmoid
            mod = jnp.power(jnp.maximum(one_minus_pt, 0.0), g)

        # focal_weight * alpha_t folded into one affine of t (trace-time consts).
        if alpha >= 0.0:
            w_at = (focal_weight * (1.0 - alpha)
                    + (focal_weight * (2.0 * alpha - 1.0)) * t)
            focal_scale = w_at * mod
        else:                   # torchvision: alpha < 0 disables alpha weighting
            focal_scale = focal_weight * mod

        # w_bce*ce + w_f*alpha_t*ce*mod == ce*(w_bce + w_f*alpha_t*mod).
        combined = ce * (bce_weight + focal_scale)

        if chunk_rows == 8:
            return combined
        return combined.reshape(chunk_rows // 8, 8, w).sum(axis=0)

    def body(c, acc):
        return acc + chunk_contrib(c)

    acc0 = jnp.zeros((8, w), jnp.float32)
    acc = jax.lax.fori_loop(0, n_chunks, body, acc0,
                            unroll=bool(n_chunks <= 8))
    partial_ref[0] = acc


def focal_loss_bce(logits, targets, *, alpha=0.25, gamma=2.0,
                   bce_weight=1.0, focal_weight=1.0, tile_rows=None,
                   transcendental_dtype=None, input_buffer_count=None):
    """bce_weight * mean(BCEWithLogits) + focal_weight * mean(sigmoid_focal)."""
    assert logits.shape == targets.shape
    n_elems = int(logits.size)
    assert n_elems > 0

    if transcendental_dtype is None:
        transcendental_dtype = _default_transcendental_dtype()
    trans_bf16 = jnp.dtype(transcendental_dtype) == jnp.dtype(jnp.bfloat16)

    w = _LANE_WIDTH
    flat_logits = logits.reshape(-1)
    flat_targets = targets.reshape(-1)

    itemsizes = (flat_logits.dtype.itemsize, flat_targets.dtype.itemsize)
    # Sub-32-bit inputs pack row pairs along sublanes -> keep tiles and chunk
    # offsets 16-row aligned so every dynamic slice stays packing-aligned.
    row_align = 16 if min(itemsizes) < 4 else 8
    chunk_rows = row_align

    r_raw = _cdiv(n_elems, w)
    r_align = _round_up(max(r_raw, row_align), row_align)

    if tile_rows is None:
        # ~1 MiB f32 per input tile (measured knee for streaming elementwise);
        # 2 inputs x 2 pipeline buffers ~ 4 MiB -> inside v5e's 16 MiB scoped
        # default and v7x's 32 MiB.
        tile_rows = min(512, r_align)
        # Give the "parallel" grid axis >= 2 (ideally 4) steps when possible
        # so v7x's two TensorCores both get work.
        if r_align >= 4 * row_align:
            tile_rows = min(tile_rows, _round_up(_cdiv(r_align, 4), row_align))
        elif r_align >= 2 * row_align:
            tile_rows = min(tile_rows, _round_up(_cdiv(r_align, 2), row_align))
    tile_rows = _round_up(max(chunk_rows, min(int(tile_rows), r_align)),
                          row_align)

    grid_rows = _cdiv(r_align, tile_rows)
    r_pad = grid_rows * tile_rows
    n_pad = r_pad * w

    if n_pad != n_elems:
        # Zero-contribution padding: logit=-100, target=0 -> ce ~ 0, p ~ 0,
        # focal ~ 0.  Every grid block is full, so no in-kernel masking.
        pad = n_pad - n_elems
        flat_logits = jnp.concatenate(
            [flat_logits, jnp.full((pad,), -100.0, dtype=flat_logits.dtype)])
        flat_targets = jnp.concatenate(
            [flat_targets, jnp.zeros((pad,), dtype=flat_targets.dtype)])

    logits2d = flat_logits.reshape(r_pad, w)
    targets2d = flat_targets.reshape(r_pad, w)

    kernel = functools.partial(
        _focal_bce_kernel,
        alpha=float(alpha), gamma=float(gamma),
        bce_weight=float(bce_weight), focal_weight=float(focal_weight),
        chunk_rows=chunk_rows, n_chunks=tile_rows // chunk_rows,
        trans_bf16=bool(trans_bf16))

    def make_in_spec():
        kwargs = {}
        if input_buffer_count is not None and int(input_buffer_count) != 2:
            # Optional deeper input pipelining (e.g. 3 on v5e if DMA exposed).
            kwargs["pipeline_mode"] = pl.Buffered(int(input_buffer_count))
        return pl.BlockSpec((tile_rows, w), lambda i: (i, 0), **kwargs)

    bytes_accessed = (n_pad * (itemsizes[0] + itemsizes[1])
                      + grid_rows * 8 * w * 4)
    cost = pl.CostEstimate(flops=22 * n_pad, transcendentals=3 * n_pad,
                           bytes_accessed=int(bytes_accessed))

    partials = pl.pallas_call(
        kernel,
        out_shape=jax.ShapeDtypeStruct((grid_rows, 8, w), jnp.float32),
        grid=(grid_rows,),
        in_specs=[make_in_spec(), make_in_spec()],
        out_specs=pl.BlockSpec((1, 8, w), lambda i: (i, 0, 0)),
        compiler_params=pltpu.CompilerParams(
            dimension_semantics=("parallel",)),
        cost_estimate=cost,
    )(logits2d, targets2d)

    # Tiny final cross-lane reduce + mean scaling (padding contributes ~0).
    return jnp.sum(partials) * (1.0 / float(n_elems))


def _reference(logits, targets, alpha=0.25, gamma=2.0,
               bce_weight=1.0, focal_weight=1.0):
    x = logits.astype(jnp.float32)
    t = targets.astype(jnp.float32)
    ce = jnp.maximum(x, 0.0) - x * t + jnp.log1p(jnp.exp(-jnp.abs(x)))
    p = jax.nn.sigmoid(x)
    p_t = p * t + (1.0 - p) * (1.0 - t)
    focal = ce * (1.0 - p_t) ** gamma
    if alpha >= 0:
        focal = (alpha * t + (1.0 - alpha) * (1.0 - t)) * focal
    return bce_weight * jnp.mean(ce) + focal_weight * jnp.mean(focal)


if __name__ == "__main__":
    key = jax.random.PRNGKey(0)
    k1, k2, k3, k4 = jax.random.split(key, 4)

    # Case 1: narrow class dim (RSNA-style multi-label head, C=14) exercises
    # the lane-dense repack; hard 0/1 targets fed as bf16 (exactly
    # representable) to halve their HBM traffic; auto transcendental dtype.
    logits = jax.random.normal(k1, (32, 14), dtype=jnp.float32) * 2.0
    targets = (jax.random.uniform(k2, (32, 14)) > 0.5).astype(jnp.float32)
    loss = jax.block_until_ready(
        focal_loss_bce(logits, targets.astype(jnp.bfloat16)))
    ref = _reference(logits, targets)
    # Slack covers the approx EUP reciprocal + (on v6e/v7x) bf16 exp/log1p.
    assert jnp.allclose(loss, ref, rtol=1e-2, atol=1e-5), (loss, ref)

    # Case 2: multi-step "parallel" grid with element-tail padding, soft f32
    # targets, non-default alpha/weights, full-f32 transcendentals.
    logits2 = jax.random.normal(k3, (100, 257), dtype=jnp.float32)
    targets2 = jax.random.uniform(k4, (100, 257), dtype=jnp.float32)
    loss2 = jax.block_until_ready(
        focal_loss_bce(logits2, targets2, alpha=0.5, bce_weight=0.7,
                       focal_weight=1.3, tile_rows=16,
                       transcendental_dtype=jnp.float32))
    ref2 = _reference(logits2, targets2, alpha=0.5,
                      bce_weight=0.7, focal_weight=1.3)
    assert jnp.allclose(loss2, ref2, rtol=5e-3, atol=1e-5), (loss2, ref2)

    print("KERNEL_OK")
</pallas_src>

<mosaic_0001>
module attributes {stable_mosaic.version = 11 : i64} {
  func.func @_focal_bce_kernel(%arg0: i32, %arg1: memref<16x512xf32, #tpu.memory_space<vmem>>, %arg2: memref<16x512xbf16, #tpu.memory_space<vmem>>, %arg3: memref<1x8x512xf32, #tpu.memory_space<vmem>>) attributes {dimension_semantics = [#tpu.dimension_semantics<parallel>], iteration_bounds = array<i64: 1>, scalar_prefetch = 0 : i64, scratch_operands = 0 : i64, tpu.core_type = #tpu.core_type<tc>, window_params = [{transform_indices = @transform_0, window_bounds = array<i64: 16, 512>}, {transform_indices = @transform_1, window_bounds = array<i64: 16, 512>}, {transform_indices = @transform_2, window_bounds = array<i64: 1, 8, 512>}]} {
    %cst = arith.constant 0.000000e+00 : f32
    %0 = vector.broadcast %cst : f32 to vector<8x512xf32>
    %c0_i32 = arith.constant 0 : i32
    %c16_i32 = arith.constant 16 : i32
    %1 = arith.muli %c0_i32, %c16_i32 : i32
    %2 = tpu.assume_multiple %1, 16 : i32
    %3 = arith.index_cast %2 : i32 to index
    %c0 = arith.constant 0 : index
    %4 = vector.load %arg1[%3, %c0] : memref<16x512xf32, #tpu.memory_space<vmem>>, vector<16x512xf32>
    %5 = arith.index_cast %2 : i32 to index
    %c0_0 = arith.constant 0 : index
    %6 = vector.load %arg2[%5, %c0_0] : memref<16x512xbf16, #tpu.memory_space<vmem>>, vector<16x512xbf16>
    %7 = arith.extf %6 : vector<16x512xbf16> to vector<16x512xf32>
    %8 = math.absf %4 : vector<16x512xf32>
    %cst_1 = arith.constant 0.000000e+00 : f32
    %9 = vector.broadcast %cst_1 : f32 to vector<16x512xf32>
    %10 = arith.subf %9, %8 : vector<16x512xf32>
    %11 = math.exp %10 : vector<16x512xf32>
    %12 = math.log1p %11 : vector<16x512xf32>
    %cst_2 = arith.constant 0.000000e+00 : f32
    %13 = vector.broadcast %cst_2 : f32 to vector<16x512xf32>
    %14 = arith.maximumf %4, %13 : vector<16x512xf32>
    %15 = arith.mulf %4, %7 : vector<16x512xf32>
    %16 = arith.subf %14, %15 : vector<16x512xf32>
    %17 = arith.addf %16, %12 : vector<16x512xf32>
    %cst_3 = arith.constant 1.000000e+00 : f32
    %18 = vector.broadcast %cst_3 : f32 to vector<16x512xf32>
    %19 = arith.addf %18, %11 : vector<16x512xf32>
    %20 = tpu.reciprocal %19 {approx = true} : vector<16x512xf32> -> vector<16x512xf32>
    %cst_4 = arith.constant 0.000000e+00 : f32
    %21 = vector.broadcast %cst_4 : f32 to vector<16x512xf32>
    %22 = arith.cmpf oge, %4, %21 : vector<16x512xf32>
    %23 = arith.mulf %11, %20 : vector<16x512xf32>
    %24 = arith.select %22, %20, %23 : vector<16x512xi1>, vector<16x512xf32>
    %25 = arith.addf %24, %7 : vector<16x512xf32>
    %26 = arith.mulf %24, %7 : vector<16x512xf32>
    %cst_5 = arith.constant 2.000000e+00 : f32
    %27 = vector.broadcast %cst_5 : f32 to vector<16x512xf32>
    %28 = arith.mulf %27, %26 : vector<16x512xf32>
    %29 = arith.subf %25, %28 : vector<16x512xf32>
    %30 = arith.mulf %29, %29 : vector<16x512xf32>
    %cst_6 = arith.constant -5.000000e-01 : f32
    %31 = vector.broadcast %cst_6 : f32 to vector<16x512xf32>
    %32 = arith.mulf %31, %7 : vector<16x512xf32>
    %cst_7 = arith.constant 7.500000e-01 : f32
    %33 = vector.broadcast %cst_7 : f32 to vector<16x512xf32>
    %34 = arith.addf %33, %32 : vector<16x512xf32>
    %35 = arith.mulf %34, %30 : vector<16x512xf32>
    %cst_8 = arith.constant 1.000000e+00 : f32
    %36 = vector.broadcast %cst_8 : f32 to vector<16x512xf32>
    %37 = arith.addf %36, %35 : vector<16x512xf32>
    %38 = arith.mulf %17, %37 : vector<16x512xf32>
    %39 = vector.shape_cast %38 : vector<16x512xf32> to vector<2x8x512xf32>
    %cst_9 = arith.constant dense<0.000000e+00> : vector<8x512xf32>
    %40 = vector.multi_reduction <add>, %39, %cst_9 [0] : vector<2x8x512xf32> to vector<8x512xf32>
    %41 = arith.addf %0, %40 : vector<8x512xf32>
    %c1_i32 = arith.constant 1 : i32
    %c0_10 = arith.constant 0 : index
    %c0_11 = arith.constant 0 : index
    %c0_12 = arith.constant 0 : index
    %42 = vector.load %arg3[%c0_10, %c0_11, %c0_12] : memref<1x8x512xf32, #tpu.memory_space<vmem>>, vector<1x8x512xf32>
    %43 = vector.shape_cast %42 : vector<1x8x512xf32> to vector<8x512xf32>
    %44 = vector.shape_cast %41 : vector<8x512xf32> to vector<1x8x512xf32>
    tpu.vector_store %arg3[%c0_10, %c0_11, %c0_12], %44 {strides = array<i32>} : memref<1x8x512xf32, #tpu.memory_space<vmem>>, vector<1x8x512xf32>,
    return
  }
  func.func @transform_0(%arg0: i32) -> (i32, i32) {
    %c0_i32 = arith.constant 0 : i32
    %c0_i32_0 = arith.constant 0 : i32
    return %arg0, %c0_i32 : i32, i32
  }
  func.func @transform_1(%arg0: i32) -> (i32, i32) {
    %c0_i32 = arith.constant 0 : i32
    %c0_i32_0 = arith.constant 0 : i32
    return %arg0, %c0_i32 : i32, i32
  }
  func.func @transform_2(%arg0: i32) -> (i32, i32, i32) {
    %c0_i32 = arith.constant 0 : i32
    %c0_i32_0 = arith.constant 0 : i32
    %c0_i32_1 = arith.constant 0 : i32
    return %arg0, %c0_i32, %c0_i32_0 : i32, i32, i32
  }
}

</mosaic_0001>

<llo_original>
// kernel: tpu_custom_call.1
$region0: #{tpu_custom_call.1}
  #allocation0 [shape = 'u32[]', space=smem, size = 0x4, offset = 0x4, fixed_abs, tag = 'smem constant byte address 0x4 - core index']
  #allocation1 [shape = 'u32[144,128]{1,0:T(1,128)}', space=vmem, size = 0x12000, scoped, tag = 'internal scratch']
  %s0 = inlined_call_operand.hbm [shape: f32[16,512], index: 0, kind: input, shape index: {}]
  %s1 = inlined_call_operand.hbm [shape: bf16[16,512], index: 1, kind: input, shape index: {}]
  %s2 = inlined_call_operand.hbm [shape: f32[1,8,512], index: 2, kind: output, shape index: {}]
  %s3 = sld [smem:[#allocation0]]
  $region26: #{tpu_custom_call.1} parent=0
    _
  %s5 = ssub.s32 1, %s3
  %s6 = scalar_select 0, %s5, %s3
  $region1: #{tpu_custom_call.1} parent=0
    #allocation2 [shape = 'u8[32768]{0}', space=vmem, size = 0x8000, scoped, tag = 'input window, operand 0, single buffered']
    #allocation3 [shape = 's32[1]{0}', space=sflag, size = 0x4, scoped, tag = 'scoped memory for tpu_custom_call.1']
    #allocation4 [shape = 's32[1]{0}', space=sflag, size = 0x4, scoped, tag = 'scoped memory for tpu_custom_call.1']
    #allocation5 [shape = 'u8[16384]{0}', space=vmem, size = 0x4000, scoped, tag = 'input window, operand 1, single buffered']
    #allocation6 [shape = 's32[1]{0}', space=sflag, size = 0x4, scoped, tag = 'scoped memory for tpu_custom_call.1']
    #allocation7 [shape = 'u8[16384]{0}', space=vmem, size = 0x4000, scoped, tag = 'output window, operand 0, single buffered']
    %7 = vsyncpa [#allocation3], 0
    %8 = vsyncpa [#allocation6], 0
    %9 = vsyncpa [#allocation4], 0
    // Predicated region
    $region2: #{tpu_custom_call.1} parent=1 // pred_check
      _
    $region3: #{tpu_custom_call.1} parent=1 // pred_check_branch
      %11 = sbr.rel (0) target = $region5
    $region4: #{tpu_custom_call.1} parent=1 // pred_region
      %s13 = ssub.s32 1024, 1024
      %14 = vsyncadd [#allocation3], %s13
      %s15 = sshll.u32 [#allocation2], 4
      %s16 = int_to_ptr.vmem [resolvable:$true] %s15
      %21 = dma.hbm_to_vmem [thread:$0]  %s0, 1024, %s16, [#allocation3], 512, 512, 32
    $region5: #{tpu_custom_call.1} parent=1 // pred_fallthru
      _
    // Predicated region
    $region6: #{tpu_custom_call.1} parent=1 // pred_check
      _
    $region7: #{tpu_custom_call.1} parent=1 // pred_check_branch
      %23 = sbr.rel (0) target = $region9
    $region8: #{tpu_custom_call.1} parent=1 // pred_region
      %s25 = ssub.s32 512, 512
      %26 = vsyncadd [#allocation6], %s25
      %s27 = sshll.u32 [#allocation5], 4
      %s28 = int_to_ptr.vmem [resolvable:$true] %s27
      %33 = dma.hbm_to_vmem [thread:$0]  %s1, 512, %s28, [#allocation6], 256, 256, 16
    $region9: #{tpu_custom_call.1} parent=1 // pred_fallthru
      _
    // Predicated region
    $region10: #{tpu_custom_call.1} parent=1 // pred_check
      _
    $region11: #{tpu_custom_call.1} parent=1 // pred_check_branch
      %35 = sbr.rel (0) target = $region13
    $region12: #{tpu_custom_call.1} parent=1 // pred_region
      %36 = dma.done [#allocation3], 1024
    $region13: #{tpu_custom_call.1} parent=1 // pred_fallthru
      _
    // Predicated region
    $region14: #{tpu_custom_call.1} parent=1 // pred_check
      _
    $region15: #{tpu_custom_call.1} parent=1 // pred_check_branch
      %38 = sbr.rel (0) target = $region17
    $region16: #{tpu_custom_call.1} parent=1 // pred_region
      %39 = dma.done [#allocation6], 512
    $region17: #{tpu_custom_call.1} parent=1 // pred_fallthru
      _
    %s40 = smul.u32 0, 4
    %s41 = smul.addr %s40, 8
    %s42 = scalar_lea.vmem [#allocation2], %s41
    %v43 = vld [vmem:[%s42] sm:$0xff]
    %v44 = vld [vmem:[%s42 + $0x8] sm:$0xff]
    %v45 = vld [vmem:[%s42 + $0x10] sm:$0xff]
    %v46 = vld [vmem:[%s42 + $0x18] sm:$0xff]
    %v47 = vld [vmem:[%s42 + $0x20] sm:$0xff]
    %v48 = vld [vmem:[%s42 + $0x28] sm:$0xff]
    %v49 = vld [vmem:[%s42 + $0x30] sm:$0xff]
    %v50 = vld [vmem:[%s42 + $0x38] sm:$0xff]
    %s51 = smul.addr %s40, 4
    %s52 = scalar_lea.vmem [#allocation5], %s51
    %v53 = vld [vmem:[%s52] sm:$0xff]
    %v54 = vld [vmem:[%s52 + $0x8] sm:$0xff]
    %v55 = vld [vmem:[%s52 + $0x10] sm:$0xff]
    %v56 = vld [vmem:[%s52 + $0x18] sm:$0xff]
    %v57 = vunpack.c.l.bf16 %v53
    %v58 = vunpack.c.h.bf16 %v53
    %v59 = vunpack.c.l.bf16 %v54
    %v60 = vunpack.c.h.bf16 %v54
    %v61 = vunpack.c.l.bf16 %v55
    %v62 = vunpack.c.h.bf16 %v55
    %v63 = vunpack.c.l.bf16 %v56
    %v64 = vunpack.c.h.bf16 %v56
    %v65 = vand.u32 2147483647, %v43
    %v66 = vand.u32 2147483647, %v44
    %v67 = vand.u32 2147483647, %v45
    %v68 = vand.u32 2147483647, %v46
    %v69 = vand.u32 2147483647, %v47
    %v70 = vand.u32 2147483647, %v48
    %v71 = vand.u32 2147483647, %v49
    %v72 = vand.u32 2147483647, %v50
    %v73 = vsub.f32 0.0, %v65
    %v74 = vsub.f32 0.0, %v66
    %v75 = vsub.f32 0.0, %v67
    %v76 = vsub.f32 0.0, %v68
    %v77 = vsub.f32 0.0, %v69
    %v78 = vsub.f32 0.0, %v70
    %v79 = vsub.f32 0.0, %v71
    %v80 = vsub.f32 0.0, %v72
    %v81 = vmul.f32 %v73, 1.442695
    %v82 = vpow.pop %v81
    %v83 = vmul.f32 %v74, 1.442695
    %v84 = vpow.pop %v83
    %v85 = vmul.f32 %v75, 1.442695
    %v86 = vpow.pop %v85
    %v87 = vmul.f32 %v76, 1.442695
    %v88 = vpow.pop %v87
    %v89 = vmul.f32 %v77, 1.442695
    %v90 = vpow.pop %v89
    %v91 = vmul.f32 %v78, 1.442695
    %v92 = vpow.pop %v91
    %v93 = vmul.f32 %v79, 1.442695
    %v94 = vpow.pop %v93
    %v95 = vmul.f32 %v80, 1.442695
    %v96 = vpow.pop %v95
    %v97 = vadd.f32 %v82, 1.0
    %v98 = vlog2.pop %v97
    %v99 = vmul.f32 %v98, 0.6931472
    %v100 = vmul.f32 -0.5, %v82
    %v101 = vadd.f32 %v100, 1.0
    %v102 = vmul.f32 %v101, %v82
    %v103 = vand.u32 2147483647, %v82
    %vm104 = vcmp.lt.f32.partialorder %v103, 0.0004427343
    %v105 = vsel %vm104, %v102, %v99
    %v106 = vadd.f32 %v84, 1.0
    %v107 = vlog2.pop %v106
    %v108 = vmul.f32 %v107, 0.6931472
    %v109 = vmul.f32 -0.5, %v84
    %v110 = vadd.f32 %v109, 1.0
    %v111 = vmul.f32 %v110, %v84
    %v112 = vand.u32 2147483647, %v84
    %vm113 = vcmp.lt.f32.partialorder %v112, 0.0004427343
    %v114 = vsel %vm113, %v111, %v108
    %v115 = vadd.f32 %v86, 1.0
    %v116 = vlog2.pop %v115
    %v117 = vmul.f32 %v116, 0.6931472
    %v118 = vmul.f32 -0.5, %v86
    %v119 = vadd.f32 %v118, 1.0
    %v120 = vmul.f32 %v119, %v86
    %v121 = vand.u32 2147483647, %v86
    %vm122 = vcmp.lt.f32.partialorder %v121, 0.0004427343
    %v123 = vsel %vm122, %v120, %v117
    %v124 = vadd.f32 %v88, 1.0
    %v125 = vlog2.pop %v124
    %v126 = vmul.f32 %v125, 0.6931472
    %v127 = vmul.f32 -0.5, %v88
    %v128 = vadd.f32 %v127, 1.0
    %v129 = vmul.f32 %v128, %v88
    %v130 = vand.u32 2147483647, %v88
    %vm131 = vcmp.lt.f32.partialorder %v130, 0.0004427343
    %v132 = vsel %vm131, %v129, %v126
    %v133 = vadd.f32 %v90, 1.0
    %v134 = vlog2.pop %v133
    %v135 = vmul.f32 %v134, 0.6931472
    %v136 = vmul.f32 -0.5, %v90
    %v137 = vadd.f32 %v136, 1.0
    %v138 = vmul.f32 %v137, %v90
    %v139 = vand.u32 2147483647, %v90
    %vm140 = vcmp.lt.f32.partialorder %v139, 0.0004427343
    %v141 = vsel %vm140, %v138, %v135
    %v142 = vadd.f32 %v92, 1.0
    %v143 = vlog2.pop %v142
    %v144 = vmul.f32 %v143, 0.6931472
    %v145 = vmul.f32 -0.5, %v92
    %v146 = vadd.f32 %v145, 1.0
    %v147 = vmul.f32 %v146, %v92
    %v148 = vand.u32 2147483647, %v92
    %vm149 = vcmp.lt.f32.partialorder %v148, 0.0004427343
    %v150 = vsel %vm149, %v147, %v144
    %v151 = vadd.f32 %v94, 1.0
    %v152 = vlog2.pop %v151
    %v153 = vmul.f32 %v152, 0.6931472
    %v154 = vmul.f32 -0.5, %v94
    %v155 = vadd.f32 %v154, 1.0
    %v156 = vmul.f32 %v155, %v94
    %v157 = vand.u32 2147483647, %v94
    %vm158 = vcmp.lt.f32.partialorder %v157, 0.0004427343
    %v159 = vsel %vm158, %v156, %v153
    %v160 = vadd.f32 %v96, 1.0
    %v161 = vlog2.pop %v160
    %v162 = vmul.f32 %v161, 0.6931472
    %v163 = vmul.f32 -0.5, %v96
    %v164 = vadd.f32 %v163, 1.0
    %v165 = vmul.f32 %v164, %v96
    %v166 = vand.u32 2147483647, %v96
    %vm167 = vcmp.lt.f32.partialorder %v166, 0.0004427343
    %v168 = vsel %vm167, %v165, %v162
    %v169 = vmax.f32 %v43, 0.0
    %v170 = vmax.f32 %v44, 0.0
    %v171 = vmax.f32 %v45, 0.0
    %v172 = vmax.f32 %v46, 0.0
    %v173 = vmax.f32 %v47, 0.0
    %v174 = vmax.f32 %v48, 0.0
    %v175 = vmax.f32 %v49, 0.0
    %v176 = vmax.f32 %v50, 0.0
    %v177 = vmul.f32 %v43, %v57
    %v178 = vmul.f32 %v44, %v58
    %v179 = vmul.f32 %v45, %v59
    %v180 = vmul.f32 %v46, %v60
    %v181 = vmul.f32 %v47, %v61
    %v182 = vmul.f32 %v48, %v62
    %v183 = vmul.f32 %v49, %v63
    %v184 = vmul.f32 %v50, %v64
    %v185 = vsub.f32 %v169, %v177
    %v186 = vsub.f32 %v170, %v178
    %v187 = vsub.f32 %v171, %v179
    %v188 = vsub.f32 %v172, %v180
    %v189 = vsub.f32 %v173, %v181
    %v190 = vsub.f32 %v174, %v182
    %v191 = vsub.f32 %v175, %v183
    %v192 = vsub.f32 %v176, %v184
    %v193 = vadd.f32 %v185, %v105
    %v194 = vadd.f32 %v186, %v114
    %v195 = vadd.f32 %v187, %v123
    %v196 = vadd.f32 %v188, %v132
    %v197 = vadd.f32 %v189, %v141
    %v198 = vadd.f32 %v190, %v150
    %v199 = vadd.f32 %v191, %v159
    %v200 = vadd.f32 %v192, %v168
    %v201 = vadd.f32 %v82, 1.0
    %v202 = vadd.f32 %v84, 1.0
    %v203 = vadd.f32 %v86, 1.0
    %v204 = vadd.f32 %v88, 1.0
    %v205 = vadd.f32 %v90, 1.0
    %v206 = vadd.f32 %v92, 1.0
    %v207 = vadd.f32 %v94, 1.0
    %v208 = vadd.f32 %v96, 1.0
    %v209 = vrcp.pop %v201
    %v210 = vrcp.pop %v202
    %v211 = vrcp.pop %v203
    %v212 = vrcp.pop %v204
    %v213 = vrcp.pop %v205
    %v214 = vrcp.pop %v206
    %v215 = vrcp.pop %v207
    %v216 = vrcp.pop %v208
    %vm217 = vcmp.ge.f32.partialorder %v43, 0.0
    %vm218 = vcmp.ge.f32.partialorder %v44, 0.0
    %vm219 = vcmp.ge.f32.partialorder %v45, 0.0
    %vm220 = vcmp.ge.f32.partialorder %v46, 0.0
    %vm221 = vcmp.ge.f32.partialorder %v47, 0.0
    %vm222 = vcmp.ge.f32.partialorder %v48, 0.0
    %vm223 = vcmp.ge.f32.partialorder %v49, 0.0
    %vm224 = vcmp.ge.f32.partialorder %v50, 0.0
    %v225 = vmul.f32 %v82, %v209
    %v226 = vmul.f32 %v84, %v210
    %v227 = vmul.f32 %v86, %v211
    %v228 = vmul.f32 %v88, %v212
    %v229 = vmul.f32 %v90, %v213
    %v230 = vmul.f32 %v92, %v214
    %v231 = vmul.f32 %v94, %v215
    %v232 = vmul.f32 %v96, %v216
    %v233 = vsel %vm217, %v209, %v225
    %v234 = vsel %vm218, %v210, %v226
    %v235 = vsel %vm219, %v211, %v227
    %v236 = vsel %vm220, %v212, %v228
    %v237 = vsel %vm221, %v213, %v229
    %v238 = vsel %vm222, %v214, %v230
    %v239 = vsel %vm223, %v215, %v231
    %v240 = vsel %vm224, %v216, %v232
    %v241 = vadd.f32 %v233, %v57
    %v242 = vadd.f32 %v234, %v58
    %v243 = vadd.f32 %v235, %v59
    %v244 = vadd.f32 %v236, %v60
    %v245 = vadd.f32 %v237, %v61
    %v246 = vadd.f32 %v238, %v62
    %v247 = vadd.f32 %v239, %v63
    %v248 = vadd.f32 %v240, %v64
    %v249 = vmul.f32 %v233, %v57
    %v250 = vmul.f32 %v234, %v58
    %v251 = vmul.f32 %v235, %v59
    %v252 = vmul.f32 %v236, %v60
    %v253 = vmul.f32 %v237, %v61
    %v254 = vmul.f32 %v238, %v62
    %v255 = vmul.f32 %v239, %v63
    %v256 = vmul.f32 %v240, %v64
    %v257 = vmul.f32 %v249, 2.0
    %v258 = vmul.f32 %v250, 2.0
    %v259 = vmul.f32 %v251, 2.0
    %v260 = vmul.f32 %v252, 2.0
    %v261 = vmul.f32 %v253, 2.0
    %v262 = vmul.f32 %v254, 2.0
    %v263 = vmul.f32 %v255, 2.0
    %v264 = vmul.f32 %v256, 2.0
    %v265 = vsub.f32 %v241, %v257
    %v266 = vsub.f32 %v242, %v258
    %v267 = vsub.f32 %v243, %v259
    %v268 = vsub.f32 %v244, %v260
    %v269 = vsub.f32 %v245, %v261
    %v270 = vsub.f32 %v246, %v262
    %v271 = vsub.f32 %v247, %v263
    %v272 = vsub.f32 %v248, %v264
    %v273 = vmul.f32 %v265, %v265
    %v274 = vmul.f32 %v266, %v266
    %v275 = vmul.f32 %v267, %v267
    %v276 = vmul.f32 %v268, %v268
    %v277 = vmul.f32 %v269, %v269
    %v278 = vmul.f32 %v270, %v270
    %v279 = vmul.f32 %v271, %v271
    %v280 = vmul.f32 %v272, %v272
    %v281 = vmul.f32 %v57, -0.5
    %v282 = vmul.f32 %v58, -0.5
    %v283 = vmul.f32 %v59, -0.5
    %v284 = vmul.f32 %v60, -0.5
    %v285 = vmul.f32 %v61, -0.5
    %v286 = vmul.f32 %v62, -0.5
    %v287 = vmul.f32 %v63, -0.5
    %v288 = vmul.f32 %v64, -0.5
    %v289 = vadd.f32 %v281, 0.75
    %v290 = vadd.f32 %v282, 0.75
    %v291 = vadd.f32 %v283, 0.75
    %v292 = vadd.f32 %v284, 0.75
    %v293 = vadd.f32 %v285, 0.75
    %v294 = vadd.f32 %v286, 0.75
    %v295 = vadd.f32 %v287, 0.75
    %v296 = vadd.f32 %v288, 0.75
    %v297 = vmul.f32 %v289, %v273
    %v298 = vmul.f32 %v290, %v274
    %v299 = vmul.f32 %v291, %v275
    %v300 = vmul.f32 %v292, %v276
    %v301 = vmul.f32 %v293, %v277
    %v302 = vmul.f32 %v294, %v278
    %v303 = vmul.f32 %v295, %v279
    %v304 = vmul.f32 %v296, %v280
    %v305 = vadd.f32 %v297, 1.0
    %v306 = vadd.f32 %v298, 1.0
    %v307 = vadd.f32 %v299, 1.0
    %v308 = vadd.f32 %v300, 1.0
    %v309 = vadd.f32 %v301, 1.0
    %v310 = vadd.f32 %v302, 1.0
    %v311 = vadd.f32 %v303, 1.0
    %v312 = vadd.f32 %v304, 1.0
    %v313 = vmul.f32 %v193, %v305
    %v314 = vmul.f32 %v194, %v306
    %v315 = vmul.f32 %v195, %v307
    %v316 = vmul.f32 %v196, %v308
    %v317 = vmul.f32 %v197, %v309
    %v318 = vmul.f32 %v198, %v310
    %v319 = vmul.f32 %v199, %v311
    %v320 = vmul.f32 %v200, %v312
    %v321 = vadd.f32 %v313, %v317
    %v322 = vadd.f32 %v314, %v318
    %v323 = vadd.f32 %v315, %v319
    %v324 = vadd.f32 %v316, %v320
    %v325 = vadd.f32 %v321, 0.0
    %v326 = vadd.f32 %v322, 0.0
    %v327 = vadd.f32 %v323, 0.0
    %v328 = vadd.f32 %v324, 0.0
    %329 = vst [vmem:[#allocation7] sm:$0xff] %v325
    %330 = vst [vmem:[#allocation7 + $0x8] sm:$0xff] %v326
    %331 = vst [vmem:[#allocation7 + $0x10] sm:$0xff] %v327
    %332 = vst [vmem:[#allocation7 + $0x18] sm:$0xff] %v328
    // Predicated region
    $region18: #{tpu_custom_call.1} parent=1 // pred_check
      _
    $region19: #{tpu_custom_call.1} parent=1 // pred_check_branch
      %334 = sbr.rel (0) target = $region21
    $region20: #{tpu_custom_call.1} parent=1 // pred_region
      %s336 = ssub.s32 512, 512
      %337 = vsyncadd [#allocation4], %s336
      %s339 = sshll.u32 [#allocation7], 4
      %s340 = int_to_ptr.vmem [resolvable:$true] %s339
      %342 = dma.vmem_to_hbm [thread:$0]  %s340, 512, %s2, [#allocation4]
    $region21: #{tpu_custom_call.1} parent=1 // pred_fallthru
      _
    // Predicated region
    $region22: #{tpu_custom_call.1} parent=1 // pred_check
      _
    $region23: #{tpu_custom_call.1} parent=1 // pred_check_branch
      %344 = sbr.rel (0) target = $region25
    $region24: #{tpu_custom_call.1} parent=1 // pred_region
      %345 = dma.done [#allocation4], 512
    $region25: #{tpu_custom_call.1} parent=1 // pred_fallthru
      _
    %346 = vsyncpa [#allocation3], 1
    %347 = vsyncpa [#allocation6], 1
    %348 = vsyncpa [#allocation4], 1

</llo_original>
